<compile_context>
chip_gen: v6e
topology: v6e:2x2x1
jax: 0.10.0
libtpu: 0.0.40
codegen_flags: <defaults>
</compile_context>

<pallas_src>
import math

import jax
import jax.numpy as jnp
from jax import lax
from jax.experimental import pallas as pl
from jax.experimental.pallas import tpu as pltpu


def _round_up(x, n):
    return ((x + n - 1) // n) * n


def _make_arcface_kernel(s, m, block_c, s_folded):
    s = float(s)
    cos_m = float(math.cos(m))
    sin_m = float(math.sin(m))
    clamp_lo = -1.0 + 1e-07          # torch.clamp bounds from the reference module
    clamp_hi = 1.0 - 1e-07
    inv_fold = 1.0 / float(s_folded)  # recovers cosine from the matmul output (per-row only)
    post = s / float(s_folded)        # remaining full-tile scale (1.0 when s is folded)

    def kernel(label_ref, xn_ref, wn_ref, out_ref):
        # MXU: sc = xn @ (s_folded * wn)^T  ->  s_folded * cosine, f32 accumulation.
        sc = lax.dot_general(
            xn_ref[...], wn_ref[...],
            dimension_numbers=(((1,), (1,)), ((), ())),
            preferred_element_type=jnp.float32,
        )                                                       # (TB, TC) f32

        # Tile-local class index compared against tile-local labels (the global
        # offset is subtracted from the (TB,1) labels, not added to the full tile).
        cls = lax.broadcasted_iota(jnp.int32, sc.shape, 1)       # (TB, TC)
        lbl_local = label_ref[...] - pl.program_id(0) * block_c  # (TB, 1)
        match = cls == lbl_local                                 # (TB, TC) one-hot mask

        # Per-row gather of the label-column cosine (0 if the label is not in
        # this class tile -- harmless, the final select never uses it then).
        cos_lbl = jnp.sum(jnp.where(match, sc, 0.0), axis=-1, keepdims=True) * inv_fold
        c = jnp.clip(cos_lbl, clamp_lo, clamp_hi)                # (TB, 1)
        # cos(acos(c) + m) = c*cos(m) - sqrt(1-c^2)*sin(m); clip keeps 1-c^2 > 0.
        tgt = (c * cos_m - jnp.sqrt(1.0 - c * c) * sin_m) * s    # (TB, 1), already * s

        other = sc if post == 1.0 else sc * post                 # s * cosine
        out_ref[...] = jnp.where(match, tgt, other).astype(out_ref.dtype)

    return kernel


def arcface_forward(x, W, label, *, s=64.0, m=0.5,
                    block_b=None, block_c=None,
                    mxu_dtype=jnp.bfloat16, out_dtype=jnp.float32):
    """ArcFace forward. x: (B,F) f32, W: (C,F) f32, label: (B,) int.
    Returns (B, C) `out_dtype` scaled ArcFace logits."""
    B, F = x.shape
    C, F2 = W.shape
    assert F == F2, "feature dims must match"
    s = float(s)

    # ---- one-time normalization in the wrapper (tiny (B,F)/(C,F) XLA ops) ----
    # Matches F.normalize(eps=1e-12): v / max(||v||_2, eps).
    xn = x / jnp.maximum(jnp.linalg.norm(x, axis=1, keepdims=True), 1e-12)
    wn = W / jnp.maximum(jnp.linalg.norm(W, axis=1, keepdims=True), 1e-12)
    # Fold s into the W operand only when it is a power of two (exact exponent
    # shift even in bf16); otherwise keep a full-tile post-scale in the kernel.
    s_folded = s if (s > 0.0 and float(math.log2(s)).is_integer()) else 1.0
    xn = xn.astype(mxu_dtype)
    wn = (wn * s_folded).astype(mxu_dtype)

    # ---- generation-aware tile selection ------------------------------------
    try:
        info = pltpu.get_tpu_info()
        vmem_cap = int(getattr(info, "vmem_capacity_bytes", 64 << 20))
    except Exception:
        vmem_cap = 64 << 20
    vmem_cap = max(vmem_cap, 48 << 20)
    big_vmem = vmem_cap >= (100 << 20)           # v5e/v6e: 128 MiB, v7x: 64 MiB
    w_itemsize = jnp.dtype(mxu_dtype).itemsize

    if block_b is None:
        block_b = 512 if big_vmem else 256
    block_b = max(8, min(_round_up(block_b, 8), _round_up(B, 8)))
    if block_b >= 128:
        block_b = _round_up(block_b, 128)        # MXU-friendly M (avoids 128x128 padding)

    if block_c is None:
        # Largest lane-multiple class tile such that
        #   2*xn + 2*wn + 2*labels + 2*out + ~3 epilogue temps <= ~3/4 of VMEM,
        # with an additional cap on the W buffer itself (~6 MiB on v7x,
        # ~16 MiB on the 128-MiB parts).
        budget = (vmem_cap * 3) // 4
        fixed = 2 * block_b * F * w_itemsize + 2 * block_b * 128 * 4
        per_c = 2 * F * w_itemsize + 5 * block_b * 4
        w_cap = ((16 << 20) if big_vmem else (6 << 20)) // max(F * w_itemsize, 1)
        block_c = min(max((budget - fixed) // per_c, 128), w_cap, 8192)
        block_c = max(128, (block_c // 128) * 128)
    block_c = min(_round_up(block_c, 128), _round_up(C, 128))
    # Prefer a block_c that divides C so W never needs to be padded/copied.
    if C % block_c != 0 and C % 128 == 0:
        for cand in range(block_c // 128, 0, -1):
            if C % (cand * 128) == 0:
                block_c = cand * 128
                break

    Bp = _round_up(B, block_b)
    Cp = _round_up(C, block_c)
    grid_b = Bp // block_b
    grid_c = Cp // block_c

    # ---- pad to whole tiles (zero rows/classes are harmless, sliced off) -----
    if Bp != B:
        xn = jnp.pad(xn, ((0, Bp - B), (0, 0)))
    if Cp != C:
        wn = jnp.pad(wn, ((0, Cp - C), (0, 0)))
    lbl = label.reshape(-1).astype(jnp.int32)
    if Bp != B:
        lbl = jnp.pad(lbl, (0, Bp - B))
    lbl2d = lbl.reshape(Bp, 1)

    # ---- VMEM budget (double-buffered I/O + epilogue temporaries) ------------
    out_itemsize = jnp.dtype(out_dtype).itemsize
    vmem_need = (2 * block_b * F * w_itemsize            # xn tiles
                 + 2 * block_c * F * w_itemsize          # wn tiles
                 + 2 * block_b * 128 * 4                 # label tiles (lane-padded)
                 + 2 * block_b * block_c * out_itemsize  # out tiles
                 + 3 * block_b * block_c * 4)            # sc / mask / select temps
    vmem_limit = int(min(max(vmem_need + (8 << 20), 32 << 20), vmem_cap - (4 << 20)))

    kernel = _make_arcface_kernel(s, m, block_c, s_folded)

    out = pl.pallas_call(
        kernel,
        out_shape=jax.ShapeDtypeStruct((Bp, Cp), out_dtype),
        # Class tiles on the OUTER axis: the big W stream comes from HBM exactly
        # once; the small xn / label tiles are re-fetched per class tile.
        grid=(grid_c, grid_b),
        in_specs=[
            pl.BlockSpec((block_b, 1), lambda jc, ib: (ib, 0)),    # labels (int32)
            pl.BlockSpec((block_b, F), lambda jc, ib: (ib, 0)),    # normalized x (bf16)
            pl.BlockSpec((block_c, F), lambda jc, ib: (jc, 0)),    # normalized, s-folded W (bf16)
        ],
        out_specs=pl.BlockSpec((block_b, block_c), lambda jc, ib: (ib, jc)),
        compiler_params=pltpu.CompilerParams(
            # Megacore shards only the class axis (each TC streams a disjoint
            # slice of W -> total W reads stay 1x on v7x); the inner batch axis
            # is a plain sequential loop over the resident W tile.
            dimension_semantics=("parallel", "arbitrary"),
            vmem_limit_bytes=vmem_limit,
        ),
    )(lbl2d, xn, wn)

    if Bp != B or Cp != C:
        out = out[:B, :C]
    return out


def _xavier_uniform(key, shape):
    # nn.init.xavier_uniform_ for a (fan_out, fan_in) weight
    fan_out, fan_in = shape
    limit = math.sqrt(6.0 / (fan_in + fan_out))
    return jax.random.uniform(key, shape, jnp.float32, -limit, limit)


def _reference(x, W, label, s=64.0, m=0.5):
    xn = x / jnp.maximum(jnp.linalg.norm(x, axis=1, keepdims=True), 1e-12)
    wn = W / jnp.maximum(jnp.linalg.norm(W, axis=1, keepdims=True), 1e-12)
    logits = xn @ wn.T
    theta = jnp.arccos(jnp.clip(logits, -1.0 + 1e-07, 1.0 - 1e-07))
    target = jnp.cos(theta + m)
    one_hot = jax.nn.one_hot(label, W.shape[0], dtype=jnp.float32)
    return (logits * (1 - one_hot) + target * one_hot) * s


if __name__ == "__main__":
    # Small shapes that still exercise a multi-tile grid when blocks are forced.
    B, NUM_FEATURES, NUM_CLASSES = 32, 128, 512
    S, M = 64.0, 0.5

    key = jax.random.PRNGKey(0)
    k_x, k_w, k_l = jax.random.split(key, 3)
    x = jax.random.normal(k_x, (B, NUM_FEATURES), jnp.float32)
    W = _xavier_uniform(k_w, (NUM_CLASSES, NUM_FEATURES))
    label = jax.random.randint(k_l, (B,), 0, NUM_CLASSES, jnp.int32)

    ref = _reference(x, W, label, s=S, m=M)

    # 1) f32 MXU operands, forced multi-tile grid (4 class tiles x 2 batch tiles):
    #    verifies tile-local margin placement, s-folding and BlockSpecs tightly.
    out_f32 = arcface_forward(x, W, label, s=S, m=M,
                              block_b=16, block_c=128, mxu_dtype=jnp.float32)
    out_f32 = jax.block_until_ready(out_f32)
    assert out_f32.shape == (B, NUM_CLASSES)
    assert jnp.allclose(out_f32, ref, atol=2e-3, rtol=2e-3), "f32 multi-tile path mismatch"

    # 2) Default fast path operands (bf16, f32 accumulation), forced multi-tile.
    out_bf16 = arcface_forward(x, W, label, s=S, m=M, block_b=16, block_c=256)
    out_bf16 = jax.block_until_ready(out_bf16)
    assert out_bf16.shape == (B, NUM_CLASSES)
    assert jnp.allclose(out_bf16, ref, atol=0.5, rtol=2e-2), "bf16 multi-tile path mismatch"

    # 3) Fully automatic (generation-aware) tile selection.
    out_def = arcface_forward(x, W, label, s=S, m=M)
    out_def = jax.block_until_ready(out_def)
    assert out_def.shape == (B, NUM_CLASSES)
    assert jnp.allclose(out_def, ref, atol=0.5, rtol=2e-2), "default-tile path mismatch"

    print("KERNEL_OK")
</pallas_src>

<mosaic_0001>
module attributes {stable_mosaic.version = 11 : i64} {
  func.func @kernel(%arg0: i32, %arg1: i32, %arg2: memref<16x1xi32, #tpu.memory_space<vmem>>, %arg3: memref<16x128xf32, #tpu.memory_space<vmem>>, %arg4: memref<128x128xf32, #tpu.memory_space<vmem>>, %arg5: memref<16x128xf32, #tpu.memory_space<vmem>>) attributes {dimension_semantics = [#tpu.dimension_semantics<parallel>, #tpu.dimension_semantics<arbitrary>], iteration_bounds = array<i64: 4, 2>, scalar_prefetch = 0 : i64, scratch_operands = 0 : i64, tpu.core_type = #tpu.core_type<tc>, window_params = [{transform_indices = @transform_0, window_bounds = array<i64: 16, 1>}, {transform_indices = @transform_1, window_bounds = array<i64: 16, 128>}, {transform_indices = @transform_2, window_bounds = array<i64: 128, 128>}, {transform_indices = @transform_3, window_bounds = array<i64: 16, 128>}]} {
    %c0 = arith.constant 0 : index
    %c0_0 = arith.constant 0 : index
    %0 = vector.load %arg3[%c0, %c0_0] : memref<16x128xf32, #tpu.memory_space<vmem>>, vector<16x128xf32>
    %c0_1 = arith.constant 0 : index
    %c0_2 = arith.constant 0 : index
    %1 = vector.load %arg4[%c0_1, %c0_2] : memref<128x128xf32, #tpu.memory_space<vmem>>, vector<128x128xf32>
    %cst = arith.constant dense<0.000000e+00> : vector<16x128xf32>
    %2 = tpu.matmul %0, %1, %cst {dimension_numbers = #tpu.dot_dimension_numbers<[1], [1], [0], [0], [0, 0, 1, 0], [], []>} : vector<16x128xf32>, vector<128x128xf32>, vector<16x128xf32> -> vector<16x128xf32>
    %3 = tpu.iota {dimensions = array<i32: 1>} : vector<16x128xi32>
    %c0_3 = arith.constant 0 : index
    %c0_4 = arith.constant 0 : index
    %4 = vector.load %arg2[%c0_3, %c0_4] : memref<16x1xi32, #tpu.memory_space<vmem>>, vector<16x1xi32>
    %c128_i32 = arith.constant 128 : i32
    %5 = arith.muli %arg0, %c128_i32 : i32
    %6 = vector.broadcast %5 : i32 to vector<16x1xi32>
    %7 = arith.subi %4, %6 : vector<16x1xi32>
    %8 = vector.broadcast %7 : vector<16x1xi32> to vector<16x128xi32>
    %9 = arith.cmpi eq, %3, %8 : vector<16x128xi32>
    %cst_5 = arith.constant 0.000000e+00 : f32
    %10 = vector.broadcast %cst_5 : f32 to vector<16x128xf32>
    %11 = arith.select %9, %2, %10 : vector<16x128xi1>, vector<16x128xf32>
    %cst_6 = arith.constant dense<0.000000e+00> : vector<16xf32>
    %12 = vector.multi_reduction <add>, %11, %cst_6 [1] : vector<16x128xf32> to vector<16xf32>
    %13 = vector.shape_cast %12 : vector<16xf32> to vector<16x1xf32>
    %cst_7 = arith.constant 1.562500e-02 : f32
    %14 = vector.broadcast %cst_7 : f32 to vector<16x1xf32>
    %15 = arith.mulf %13, %14 : vector<16x1xf32>
    %cst_8 = arith.constant -0.99999988 : f32
    %cst_9 = arith.constant 0.99999988 : f32
    %16 = vector.broadcast %cst_8 : f32 to vector<16x1xf32>
    %17 = arith.maximumf %16, %15 : vector<16x1xf32>
    %18 = vector.broadcast %cst_9 : f32 to vector<16x1xf32>
    %19 = arith.minimumf %18, %17 : vector<16x1xf32>
    %cst_10 = arith.constant 0.87758255 : f32
    %20 = vector.broadcast %cst_10 : f32 to vector<16x1xf32>
    %21 = arith.mulf %19, %20 : vector<16x1xf32>
    %22 = arith.mulf %19, %19 : vector<16x1xf32>
    %cst_11 = arith.constant 1.000000e+00 : f32
    %23 = vector.broadcast %cst_11 : f32 to vector<16x1xf32>
    %24 = arith.subf %23, %22 : vector<16x1xf32>
    %25 = math.sqrt %24 : vector<16x1xf32>
    %cst_12 = arith.constant 0.47942555 : f32
    %26 = vector.broadcast %cst_12 : f32 to vector<16x1xf32>
    %27 = arith.mulf %25, %26 : vector<16x1xf32>
    %28 = arith.subf %21, %27 : vector<16x1xf32>
    %cst_13 = arith.constant 6.400000e+01 : f32
    %29 = vector.broadcast %cst_13 : f32 to vector<16x1xf32>
    %30 = arith.mulf %28, %29 : vector<16x1xf32>
    %31 = vector.shape_cast %30 : vector<16x1xf32> to vector<16x1xf32>
    %32 = vector.broadcast %31 : vector<16x1xf32> to vector<16x128xf32>
    %33 = arith.select %9, %32, %2 : vector<16x128xi1>, vector<16x128xf32>
    %c0_14 = arith.constant 0 : index
    %c0_15 = arith.constant 0 : index
    %34 = vector.load %arg5[%c0_14, %c0_15] : memref<16x128xf32, #tpu.memory_space<vmem>>, vector<16x128xf32>
    tpu.vector_store %arg5[%c0_14, %c0_15], %33 {strides = array<i32>} : memref<16x128xf32, #tpu.memory_space<vmem>>, vector<16x128xf32>,
    return
  }
  func.func @transform_0(%arg0: i32, %arg1: i32) -> (i32, i32) {
    %c0_i32 = arith.constant 0 : i32
    %c0_i32_0 = arith.constant 0 : i32
    return %arg1, %c0_i32 : i32, i32
  }
  func.func @transform_1(%arg0: i32, %arg1: i32) -> (i32, i32) {
    %c0_i32 = arith.constant 0 : i32
    %c0_i32_0 = arith.constant 0 : i32
    return %arg1, %c0_i32 : i32, i32
  }
  func.func @transform_2(%arg0: i32, %arg1: i32) -> (i32, i32) {
    %c0_i32 = arith.constant 0 : i32
    %c0_i32_0 = arith.constant 0 : i32
    return %arg0, %c0_i32 : i32, i32
  }
  func.func @transform_3(%arg0: i32, %arg1: i32) -> (i32, i32) {
    %c0_i32 = arith.constant 0 : i32
    return %arg1, %arg0 : i32, i32
  }
}

</mosaic_0001>

<llo_original>
// kernel: tpu_custom_call.1
$region0: #{tpu_custom_call.1}
  #allocation0 [shape = 'u32[]', space=smem, size = 0x4, offset = 0x4, fixed_abs, tag = 'smem constant byte address 0x4 - core index']
  #allocation1 [shape = 'u32[144,128]{1,0:T(1,128)}', space=vmem, size = 0x12000, scoped, tag = 'internal scratch']
  %s0 = inlined_call_operand.vmem [shape: s32[32,1], index: 0, kind: input, shape index: {}]
  %s1 = inlined_call_operand.vmem [shape: f32[32,128], index: 1, kind: input, shape index: {}]
  %s2 = inlined_call_operand.hbm [shape: f32[512,128], index: 2, kind: input, shape index: {}]
  %s3 = inlined_call_operand.hbm [shape: f32[32,512], index: 3, kind: output, shape index: {}]
  %s4 = sld [smem:[#allocation0]]
  $region49: #{tpu_custom_call.1} parent=0
    _
  %s6 = ssub.s32 1, %s4
  %s7 = scalar_select 0, %s6, %s4
  $region1: #{tpu_custom_call.1} parent=0
    #allocation2 [shape = 'u8[131072]{0}', space=vmem, size = 0x20000, scoped, tag = 'input window, operand 2']
    #allocation3 [shape = 's32[2]{0}', space=sflag, size = 0x8, scoped, tag = 'scoped memory for tpu_custom_call.1']
    #allocation4 [shape = 's32[2]{0}', space=sflag, size = 0x8, scoped, tag = 'scoped memory for tpu_custom_call.1']
    #allocation5 [shape = 'u8[16384]{0}', space=vmem, size = 0x4000, scoped, tag = 'output window, operand 0']
    %8 = vsyncpa [#allocation3], 0
    %s9 = scalar_lea.sflag [#allocation3], 1
    %10 = vsyncpa %s9, 0
    %11 = vsyncpa [#allocation4], 0
    %s12 = scalar_lea.sflag [#allocation4], 1
    %13 = vsyncpa %s12, 0
    loop: start=0, step=1, limit=10
    $region2: #{tpu_custom_call.1} parent=1 // loop_pre_header
      _
    $region3: #{tpu_custom_call.1} parent=1 // loop_header
      %s15 = sphi 0, %s19
      %p16 = scmp.ge.s32.totalorder %s15, 10
      %s22 = sphi 0, %s34
      %s23 = sphi 0, %s30
      %s24 = sphi 0, %s22
      %s25 = sphi 0, %s23
      %s26 = sphi 0, %s24
      %s27 = sphi 0, %s25
      %s37 = sphi 0, %s39
      %s40 = sphi 0, %s37
      %s41 = sphi 0, %s40
      %s57 = sphi 0, %s41
      %s63 = sphi 0, %s65
      %s66 = sphi 0, %s63
      %s67 = sphi 0, %s66
      %s83 = sphi 0, %s67
      %s89 = sphi 0, %s91
      %s92 = sphi 0, %s89
      %s93 = sphi 0, %s92
      %s109 = sphi 0, %s93
      %s117 = sphi 0, %s119
      %s120 = sphi 0, %s117
      %s121 = sphi 0, %s120
      %s137 = sphi 0, %s121
    $region4: #{tpu_custom_call.1} parent=1 // loop_header_branch
      %18 = sbr.rel (%p16) target = $region8
    $region5: #{tpu_custom_call.1} parent=1 // loop_body
      %s20 = ssub.s32 %s15, 1
      %s21 = ssub.s32 %s15, 2
      %s28 = sadd.s32 1, %s23
      %p29 = scmp.ge.s32.totalorder %s28, 2
      %s30 = scalar_select %p29, 0, %s28
      %s31 = sadd.s32 1, %s22
      %s32 = scalar_select %p29, %s31, %s22
      %p33 = scmp.ge.s32.totalorder %s32, 4
      %s34 = scalar_select %p33, 0, %s32
      %s35 = ssub.s32 %s23, %s30
      %p36 = scmp.eq.s32.totalorder %s35, 0
      %s38 = sadd.s32 %s37, 1
      %s39 = scalar_select %p36, %s37, %s38
      %p42 = pneg %p36
      %p43 = scmp.eq.s32.totalorder %s15, 7
      %p44 = por %p42, %p43
      %p45 = scmp.ne.s32.totalorder %s37, %s40
      %p46 = scmp.eq.s32.totalorder %s15, 0
      %p47 = por %p45, %p46
      %p48 = scmp.ne.s32.totalorder %s37, %s40
      %p49 = scmp.eq.s32.totalorder %s20, 7
      %p50 = por %p48, %p49
      %p51 = scmp.ne.s32.totalorder %s40, %s41
      %p52 = scmp.eq.s32.totalorder %s20, 0
      %p53 = por %p51, %p52
      %p54 = scmp.ne.s32.totalorder %s40, %s41
      %p55 = scmp.eq.s32.totalorder %s21, 7
      %p56 = por %p54, %p55
      %p58 = scmp.ne.s32.totalorder %s41, %s57
      %p59 = scmp.eq.s32.totalorder %s21, 0
      %p60 = por %p58, %p59
      %s61 = ssub.s32 %s23, %s30
      %p62 = scmp.eq.s32.totalorder %s61, 0
      %s64 = sadd.s32 %s63, 1
      %s65 = scalar_select %p62, %s63, %s64
      %p68 = pneg %p62
      %p69 = scmp.eq.s32.totalorder %s15, 7
      %p70 = por %p68, %p69
      %p71 = scmp.ne.s32.totalorder %s63, %s66
      %p72 = scmp.eq.s32.totalorder %s15, 0
      %p73 = por %p71, %p72
      %p74 = scmp.ne.s32.totalorder %s63, %s66
      %p75 = scmp.eq.s32.totalorder %s20, 7
      %p76 = por %p74, %p75
      %p77 = scmp.ne.s32.totalorder %s66, %s67
      %p78 = scmp.eq.s32.totalorder %s20, 0
      %p79 = por %p77, %p78
      %p80 = scmp.ne.s32.totalorder %s66, %s67
      %p81 = scmp.eq.s32.totalorder %s21, 7
      %p82 = por %p80, %p81
      %p84 = scmp.ne.s32.totalorder %s67, %s83
      %p85 = scmp.eq.s32.totalorder %s21, 0
      %p86 = por %p84, %p85
      %s87 = ssub.s32 %s22, %s34
      %p88 = scmp.eq.s32.totalorder %s87, 0
      %s90 = sadd.s32 %s89, 1
      %s91 = scalar_select %p88, %s89, %s90
      %p94 = pneg %p88
      %p95 = scmp.eq.s32.totalorder %s15, 7
      %p96 = por %p94, %p95
      %p97 = scmp.ne.s32.totalorder %s89, %s92
      %p98 = scmp.eq.s32.totalorder %s15, 0
      %p99 = por %p97, %p98
      %p100 = scmp.ne.s32.totalorder %s89, %s92
      %p101 = scmp.eq.s32.totalorder %s20, 7
      %p102 = por %p100, %p101
      %p103 = scmp.ne.s32.totalorder %s92, %s93
      %p104 = scmp.eq.s32.totalorder %s20, 0
      %p105 = por %p103, %p104
      %p106 = scmp.ne.s32.totalorder %s92, %s93
      %p107 = scmp.eq.s32.totalorder %s21, 7
      %p108 = por %p106, %p107
      %p110 = scmp.ne.s32.totalorder %s93, %s109
      %p111 = scmp.eq.s32.totalorder %s21, 0
      %p112 = por %p110, %p111
      %s113 = ssub.s32 %s23, %s30
      %s114 = ssub.s32 %s22, %s34
      %s115 = sor.u32 %s113, %s114
      %p116 = scmp.eq.s32.totalorder %s115, 0
      %s118 = sadd.s32 %s117, 1
      %s119 = scalar_select %p116, %s117, %s118
      %p122 = pneg %p116
      %p123 = scmp.eq.s32.totalorder %s15, 7
      %p124 = por %p122, %p123
      %p125 = scmp.ne.s32.totalorder %s117, %s120
      %p126 = scmp.eq.s32.totalorder %s15, 0
      %p127 = por %p125, %p126
      %p128 = scmp.ne.s32.totalorder %s117, %s120
      %p129 = scmp.eq.s32.totalorder %s20, 7
      %p130 = por %p128, %p129
      %p131 = scmp.ne.s32.totalorder %s120, %s121
      %p132 = scmp.eq.s32.totalorder %s20, 0
      %p133 = por %p131, %p132
      %p134 = scmp.ne.s32.totalorder %s120, %s121
      %p135 = scmp.eq.s32.totalorder %s21, 7
      %p136 = por %p134, %p135
      %p138 = scmp.ne.s32.totalorder %s121, %s137
      %p139 = scmp.eq.s32.totalorder %s21, 0
      %p140 = por %p138, %p139
      %p141 = scmp.le.s32.totalorder 1, %s15
      %p142 = scmp.lt.s32.totalorder %s15, 9
      %p143 = pnand %p141, %p142
      %p144 = pneg %p143
      // Predicated region
      $region9: #{tpu_custom_call.1} parent=5 // pred_check
        _
      $region10: #{tpu_custom_call.1} parent=5 // pred_check_branch
        %146 = sbr.rel (%p143) target = $region12
      $region11: #{tpu_custom_call.1} parent=5 // pred_region
        %s147 = ssub.s32 %s15, 1
      $region12: #{tpu_custom_call.1} parent=5 // pred_fallthru
        _
      %p148 = scmp.lt.s32.totalorder %s15, 8
      // Predicated region
      $region13: #{tpu_custom_call.1} parent=5 // pred_check
        %p149 = pneg %p148
      $region14: #{tpu_custom_call.1} parent=5 // pred_check_branch
        %151 = sbr.rel (%p149) target = $region16
      $region15: #{tpu_custom_call.1} parent=5 // pred_region
        // Predicated region
        $region17: #{tpu_custom_call.1} parent=15 // pred_check
          %p152 = pneg %p47
        $region18: #{tpu_custom_call.1} parent=15 // pred_check_branch
          %154 = sbr.rel (%p152) target = $region20
        $region19: #{tpu_custom_call.1} parent=15 // pred_region
          %s155 = smul.u32 2, %s23
          %p156 = scmp.lt.s32.totalorder %s155, 3
          %s157 = scalar_select %p156, %s155, 3
          %s158 = smul.addr %s157, 8
          %s159 = scalar_lea.vmem %s0, %s158
          %s160 = smul.u32 2, %s23
        $region20: #{tpu_custom_call.1} parent=15 // pred_fallthru
          _
        // Predicated region
        $region21: #{tpu_custom_call.1} parent=15 // pred_check
          %p161 = pneg %p73
        $region22: #{tpu_custom_call.1} parent=15 // pred_check_branch
          %163 = sbr.rel (%p161) target = $region24
        $region23: #{tpu_custom_call.1} parent=15 // pred_region
          %s164 = smul.u32 2, %s23
          %p165 = scmp.lt.s32.totalorder %s164, 3
          %s166 = scalar_select %p165, %s164, 3
          %s167 = smul.addr %s166, 8
          %s168 = scalar_lea.vmem %s1, %s167
          %s169 = smul.u32 2, %s23
        $region24: #{tpu_custom_call.1} parent=15 // pred_fallthru
          _
        // Predicated region
        $region25: #{tpu_custom_call.1} parent=15 // pred_check
          %p170 = pneg %p99
        $region26: #{tpu_custom_call.1} parent=15 // pred_check_branch
          %172 = sbr.rel (%p170) target = $region28
        $region27: #{tpu_custom_call.1} parent=15 // pred_region
          %s173 = sand.u32 %s89, 1
          %s174 = scalar_lea.sflag [#allocation3], %s173
          %s175 = sand.u32 %s89, 1
          %s176 = smul.addr %s175, 128
          %s177 = scalar_lea.vmem [#allocation2], %s176
          %s178 = smul.u32 16, %s22
          %s180 = ssub.s32 2048, 2048
          %181 = vsyncadd %s174, %s180
          %s182 = smul.addr %s178, 128
          %s183 = scalar_lea.hbm %s2, %s182
          %s184 = sshll.u32 %s177, 4
          %s185 = int_to_ptr.vmem [resolvable:$true] %s184
          %190 = dma.hbm_to_vmem [thread:$0]  %s183, 2048, %s185, %s174, 128, 128, 8
        $region28: #{tpu_custom_call.1} parent=15 // pred_fallthru
          _
      $region16: #{tpu_custom_call.1} parent=5 // pred_fallthru
        _
      %p191 = scmp.le.s32.totalorder 1, %s15
      %p192 = scmp.lt.s32.totalorder %s15, 9
      %p193 = pnand %p191, %p192
      %p194 = pneg %p193
      // Predicated region
      $region29: #{tpu_custom_call.1} parent=5 // pred_check
        _
      $region30: #{tpu_custom_call.1} parent=5 // pred_check_branch
        %196 = sbr.rel (%p193) target = $region32
      $region31: #{tpu_custom_call.1} parent=5 // pred_region
        %s197 = ssub.s32 %s15, 1
        %s198 = sand.u32 %s92, 1
        %s199 = scalar_lea.sflag [#allocation3], %s198
        %s200 = sand.u32 %s92, 1
        %s201 = smul.addr %s200, 128
        %s202 = scalar_lea.vmem [#allocation2], %s201
        // Predicated region
        $region33: #{tpu_custom_call.1} parent=31 // pred_check
          %p203 = pneg %p105
        $region34: #{tpu_custom_call.1} parent=31 // pred_check_branch
          %205 = sbr.rel (%p203) target = $region36
        $region35: #{tpu_custom_call.1} parent=31 // pred_region
          %206 = dma.done %s199, 2048
        $region36: #{tpu_custom_call.1} parent=31 // pred_fallthru
          _
        %s207 = smul.u32 2, %s25
        %p208 = scmp.lt.s32.totalorder %s207, 3
        %s209 = scalar_select %p208, %s207, 3
        %s210 = smul.addr %s209, 8
        %s211 = scalar_lea.vmem %s0, %s210
        %p212 = pneg %p53
        %p213 = pneg %p50
        %s214 = smul.u32 2, %s25
        %p215 = scmp.lt.s32.totalorder %s214, 3
        %s216 = scalar_select %p215, %s214, 3
        %s217 = smul.addr %s216, 8
        %s218 = scalar_lea.vmem %s1, %s217
        %p219 = pneg %p79
        %p220 = pneg %p76
        %s221 = sand.u32 %s92, 1
        %s222 = scalar_lea.sflag [#allocation3], %s221
        %s223 = sand.u32 %s92, 1
        %s224 = smul.addr %s223, 128
        %s225 = scalar_lea.vmem [#allocation2], %s224
        %p226 = pneg %p105
        %p227 = pneg %p102
        %p228 = pneg %p133
        %p229 = pneg %p130
        %s230 = sand.u32 %s120, 1
        %s231 = scalar_lea.sflag [#allocation4], %s230
        %s232 = sand.u32 %s120, 1
        %s233 = smul.addr %s232, 16
        %s234 = scalar_lea.vmem [#allocation5], %s233
        %s235 = smul.u32 2, %s25
        %p236 = scmp.lt.s32.totalorder %s235, 3
        %s237 = scalar_select %p236, %s235, 3
        %s238 = smul.addr %s237, 8
        %s239 = scalar_lea.vmem %s0, %s238
        %s240 = smul.u32 2, %s25
        %s241 = smul.u32 2, %s25
        %p242 = scmp.lt.s32.totalorder %s241, 3
        %s243 = scalar_select %p242, %s241, 3
        %s244 = smul.addr %s243, 8
        %s245 = scalar_lea.vmem %s1, %s244
        %s246 = smul.u32 2, %s25
        %s247 = smul.u32 16, %s24
        %s248 = smul.u32 2, %s25
        %v249 = vld [vmem:[%s245] sm:$0xff]
        %v250 = vld [vmem:[%s245 + $0x8] sm:$0xff]
        %v251 = vld [vmem:[%s202] sm:$0xff]
        %v252 = vld [vmem:[%s202 + $0x8] sm:$0xff]
        %v253 = vld [vmem:[%s202 + $0x10] sm:$0xff]
        %v254 = vld [vmem:[%s202 + $0x18] sm:$0xff]
        %v255 = vld [vmem:[%s202 + $0x20] sm:$0xff]
        %v256 = vld [vmem:[%s202 + $0x28] sm:$0xff]
        %v257 = vld [vmem:[%s202 + $0x30] sm:$0xff]
        %v258 = vld [vmem:[%s202 + $0x38] sm:$0xff]
        %v259 = vld [vmem:[%s202 + $0x40] sm:$0xff]
        %v260 = vld [vmem:[%s202 + $0x48] sm:$0xff]
        %v261 = vld [vmem:[%s202 + $0x50] sm:$0xff]
        %v262 = vld [vmem:[%s202 + $0x58] sm:$0xff]
        %v263 = vld [vmem:[%s202 + $0x60] sm:$0xff]
        %v264 = vld [vmem:[%s202 + $0x68] sm:$0xff]
        %v265 = vld [vmem:[%s202 + $0x70] sm:$0xff]
        %v266 = vld [vmem:[%s202 + $0x78] sm:$0xff]
        %267 = vmatprep.subr.mxu0 0.0
        %268 = vmatpush1.xpose.msra.mxu0 %v266
        %269 = vmatprep.subr.mxu0 0.0
        %270 = vmatpush1.xpose.msra.mxu0 %v265
        %271 = vmatprep.subr.mxu0 0.0
        %272 = vmatpush1.xpose.msra.mxu0 %v264
        %273 = vmatprep.subr.mxu0 0.0
        %274 = vmatpush1.xpose.msra.mxu0 %v263
        %275 = vmatprep.subr.mxu0 0.0
        %276 = vmatpush1.xpose.msra.mxu0 %v262
        %277 = vmatprep.subr.mxu0 0.0
        %278 = vmatpush1.xpose.msra.mxu0 %v261
        %279 = vmatprep.subr.mxu0 0.0
        %280 = vmatpush1.xpose.msra.mxu0 %v260
        %281 = vmatprep.subr.mxu0 0.0
        %282 = vmatpush1.xpose.msra.mxu0 %v259
        %283 = vmatprep.subr.mxu0 0.0
        %284 = vmatpush1.xpose.msra.mxu0 %v258
        %285 = vmatprep.subr.mxu0 0.0
        %286 = vmatpush1.xpose.msra.mxu0 %v257
        %287 = vmatprep.subr.mxu0 0.0
        %288 = vmatpush1.xpose.msra.mxu0 %v256
        %289 = vmatprep.subr.mxu0 0.0
        %290 = vmatpush1.xpose.msra.mxu0 %v255
        %291 = vmatprep.subr.mxu0 0.0
        %292 = vmatpush1.xpose.msra.mxu0 %v254
        %293 = vmatprep.subr.mxu0 0.0
        %294 = vmatpush1.xpose.msra.mxu0 %v253
        %295 = vmatprep.subr.mxu0 0.0
        %296 = vmatpush1.xpose.msra.mxu0 %v252
        %297 = vmatprep.subr.mxu0 0.0
        %298 = vmatpush1.xpose.msra.mxu0 %v251
        %299 = vmatprep.subr.mxu0 0.0
        %300 = vmatpush2.xpose.msra.mxu0 0.0
        %301 = vmatprep.subr.mxu0 0.0
        %302 = vmatpush2.xpose.msra.mxu0 0.0
        %303 = vmatprep.subr.mxu0 0.0
        %304 = vmatpush2.xpose.msra.mxu0 0.0
        %305 = vmatprep.subr.mxu0 0.0
        %306 = vmatpush2.xpose.msra.mxu0 0.0
        %307 = vmatprep.subr.mxu0 0.0
        %308 = vmatpush2.xpose.msra.mxu0 0.0
        %309 = vmatprep.subr.mxu0 0.0
        %310 = vmatpush2.xpose.msra.mxu0 0.0
        %311 = vmatprep.subr.mxu0 0.0
        %312 = vmatpush2.xpose.msra.mxu0 0.0
        %313 = vmatprep.subr.mxu0 0.0
        %314 = vmatpush2.xpose.msra.mxu0 0.0
        %315 = vmatprep.subr.mxu0 0.0
        %316 = vmatpush2.xpose.msra.mxu0 0.0
        %317 = vmatprep.subr.mxu0 0.0
        %318 = vmatpush2.xpose.msra.mxu0 0.0
        %319 = vmatprep.subr.mxu0 0.0
        %320 = vmatpush2.xpose.msra.mxu0 0.0
        %321 = vmatprep.subr.mxu0 0.0
        %322 = vmatpush2.xpose.msra.mxu0 0.0
        %323 = vmatprep.subr.mxu0 0.0
        %324 = vmatpush2.xpose.msra.mxu0 0.0
        %325 = vmatprep.subr.mxu0 0.0
        %326 = vmatpush2.xpose.msra.mxu0 0.0
        %327 = vmatprep.subr.mxu0 0.0
        %328 = vmatpush2.xpose.msra.mxu0 0.0
        %329 = vmatprep.subr.mxu0 0.0
        %330 = vmatpush2.xpose.msra.mxu0 0.0
        %331 = vmatprep.mubr.f32.mxu0 0.0
        %332 = vmatmul.mubr.f32.gmra.mxu0 %v249
        %v333 = vpop.f32.mrf.mxu0
        %v334 = vadd.f32 0.0, %v333
        %v335 = vpop.f32.mrf.mxu0
        %336 = vmatprep.mubr.f32.mxu0 0.0
        %337 = vmatmul.mubr.f32.gmra.mxu0 %v250
        %v338 = vpop.f32.mrf.mxu0
        %v339 = vadd.f32 0.0, %v338
        %v340 = vpop.f32.mrf.mxu0
        %341 = vdwg.mxu0
        %v342 = vlaneseq
        %v343 = vand.u32 %v342, 127
        %v344 = vld [vmem:[%s239] sm:$0xff]
        %v345 = vld [vmem:[%s239 + $0x8] sm:$0xff]
        %s346 = smul.u32 %s24, 128
        %v347 = vstv %s346
        %v348 = vsub.s32 %v344, %v347
        %v349 = vsub.s32 %v345, %v347
        %350 = vset.pattern.permute.xlu0 0
        %351 = vperm.xlu0 %350, %v348
        %v352 = vpop.permute.xlu0 %351
        %353 = vset.pattern.permute.xlu0 0
        %354 = vperm.xlu0 %353, %v349
        %v355 = vpop.permute.xlu0 %354
        %vm356 = vcmp.eq.s32.totalorder %v343, %v352
        %vm357 = vcmp.eq.s32.totalorder %v343, %v355
        %v358 = vsel %vm356, %v334, 0.0
        %v359 = vsel %vm357, %v339, 0.0
        %360 = vadd.xlane.f32.xlu0 %v358
        %v361 = vpop.xlane.xlu0 %360
        %362 = vadd.xlane.f32.xlu0 %v359
        %v363 = vpop.xlane.xlu0 %362
        %v364 = vmul.f32 %v361, 0.015625
        %v365 = vmul.f32 %v363, 0.015625
        %v366 = vmax.f32 %v364, -0.9999999
        %v367 = vmax.f32 %v365, -0.9999999
        %v368 = vmin.f32 %v366, 0.9999999
        %v369 = vmin.f32 %v367, 0.9999999
        %v370 = vmul.f32 %v368, 0.87758255
        %v371 = vmul.f32 %v369, 0.87758255
        %v372 = vmul.f32 %v368, %v368
        %v373 = vmul.f32 %v369, %v369
        %v374 = vsub.f32 1.0, %v372
        %v375 = vsub.f32 1.0, %v373
        %v376 = vrsqrt.pop %v374
        %v377 = vmul.f32 %v374, %v376
        %vm378 = vcmp.eq.f32.partialorder %v374, inf
        %v379 = vsel %vm378, %v374, %v377
        %vm380 = vcmp.eq.f32.partialorder %v374, 0.0
        %v381 = vand.u32 %v374, 2147483648
        %v382 = vsel %vm380, %v381, %v379
        %v383 = vrsqrt.pop %v375
        %v384 = vmul.f32 %v375, %v383
        %vm385 = vcmp.eq.f32.partialorder %v375, inf
        %v386 = vsel %vm385, %v375, %v384
        %vm387 = vcmp.eq.f32.partialorder %v375, 0.0
        %v388 = vand.u32 %v375, 2147483648
        %v389 = vsel %vm387, %v388, %v386
        %v390 = vmul.f32 %v382, 0.47942555
        %v391 = vmul.f32 %v389, 0.47942555
        %v392 = vsub.f32 %v370, %v390
        %v393 = vsub.f32 %v371, %v391
        %v394 = vmul.f32 %v392, 64.0
        %v395 = vmul.f32 %v393, 64.0
        %v396 = vsel %vm356, %v394, %v334
        %v397 = vsel %vm357, %v395, %v339
        %398 = vst [vmem:[%s234] sm:$0xff] %v396
        %399 = vst [vmem:[%s234 + $0x8] sm:$0xff] %v397
        %s400 = sand.u32 %s120, 1
        %s401 = scalar_lea.sflag [#allocation4], %s400
        %s402 = sand.u32 %s120, 1
        %s403 = smul.addr %s402, 16
        %s404 = scalar_lea.vmem [#allocation5], %s403
        // Predicated region
        $region37: #{tpu_custom_call.1} parent=31 // pred_check
          %p405 = pneg %p130
        $region38: #{tpu_custom_call.1} parent=31 // pred_check_branch
          %407 = sbr.rel (%p405) target = $region40
        $region39: #{tpu_custom_call.1} parent=31 // pred_region
          %s408 = smul.u32 2, %s25
          %s410 = ssub.s32 256, 256
          %411 = vsyncadd %s401, %s410
          %s412 = smul.addr %s408, 4
          %s413 = sadd.s32 %s24, %s412
          %s414 = smul.addr %s413, 128
          %s415 = scalar_lea.hbm %s3, %s414
          %s416 = sshll.u32 %s404, 4
          %s417 = int_to_ptr.vmem [resolvable:$true] %s416
          %422 = dma.vmem_to_hbm [thread:$0]  %s417, 256, %s415, %s401, 128, 512, 8
        $region40: #{tpu_custom_call.1} parent=31 // pred_fallthru
          _
      $region32: #{tpu_custom_call.1} parent=5 // pred_fallthru
        _
      %p423 = scmp.le.s32.totalorder 2, %s15
      // Predicated region
      $region41: #{tpu_custom_call.1} parent=5 // pred_check
        %p424 = pneg %p423
      $region42: #{tpu_custom_call.1} parent=5 // pred_check_branch
        %426 = sbr.rel (%p424) target = $region44
      $region43: #{tpu_custom_call.1} parent=5 // pred_region
        %s427 = ssub.s32 %s15, 2
        // Predicated region
        $region45: #{tpu_custom_call.1} parent=43 // pred_check
          %p428 = pneg %p136
        $region46: #{tpu_custom_call.1} parent=43 // pred_check_branch
          %430 = sbr.rel (%p428) target = $region48
        $region47: #{tpu_custom_call.1} parent=43 // pred_region
          %s431 = sand.u32 %s121, 1
          %s432 = scalar_lea.sflag [#allocation4], %s431
          %s433 = sand.u32 %s121, 1
          %s434 = smul.addr %s433, 16
          %s435 = scalar_lea.vmem [#allocation5], %s434
          %436 = dma.done %s432, 256
        $region48: #{tpu_custom_call.1} parent=43 // pred_fallthru
          _
      $region44: #{tpu_custom_call.1} parent=5 // pred_fallthru
        _
    $region6: #{tpu_custom_call.1} parent=1 // loop_footer
      %s19 = sadd.s32 1, %s15
    $region7: #{tpu_custom_call.1} parent=1 // loop_footer_branch
      %14 = sbr.rel target = $region3
    $region8: #{tpu_custom_call.1} parent=1 // loop_exit
      _
    %437 = vsyncpa [#allocation3], 1
    %s438 = scalar_lea.sflag [#allocation3], 1
    %439 = vsyncpa %s438, 1
    %440 = vsyncpa [#allocation4], 1
    %s441 = scalar_lea.sflag [#allocation4], 1
    %442 = vsyncpa %s441, 1

</llo_original>
